<compile_context>
chip_gen: v7x
topology: tpu7x:2x2x1
jax: 0.10.0
libtpu: 0.0.40
codegen_flags: <defaults>
</compile_context>

<pallas_src>
import jax
import jax.numpy as jnp
from jax import lax
from jax.experimental import pallas as pl
from jax.experimental.pallas import tpu as pltpu


# --------------------------------------------------------------------------------------
# Kernels
# --------------------------------------------------------------------------------------

def _mlp_resident_kernel(x_ref, wfc_ref, wproj_ref, o_ref):
    """Both weight matrices fully VMEM-resident (constant index_map).

    x_ref:     (tm, dim)    compute-dtype row tile
    wfc_ref:   (hdim, dim)  native PyTorch layout (out_features, in_features)
    wproj_ref: (dim, hdim)  native PyTorch layout
    o_ref:     (tm, dim)    output tile
    """
    # h = x @ W_fc^T  (contract last dims of both operands -> no transpose needed)
    h = lax.dot_general(
        x_ref[...], wfc_ref[...],
        dimension_numbers=(((1,), (1,)), ((), ())),
        preferred_element_type=jnp.float32)
    h = jnp.maximum(h, 0.0)
    h = h * h
    # y = relu(h)^2 @ W_proj^T
    y = lax.dot_general(
        h.astype(wproj_ref.dtype), wproj_ref[...],
        dimension_numbers=(((1,), (1,)), ((), ())),
        preferred_element_type=jnp.float32)
    o_ref[...] = y.astype(o_ref.dtype)


def _mlp_streamed_kernel(x_ref, wfc_ref, wproj_ref, o_ref, acc_ref):
    """Weights streamed along the hidden (reduction) axis; f32 accumulator in VMEM.

    x_ref:     (tm, dim)
    wfc_ref:   (tk, dim)   hidden-dim slice of W_fc (native layout)
    wproj_ref: (dim, tk)   matching hidden-dim slice of W_proj (native layout)
    o_ref:     (tm, dim)   resident across the reduction axis
    acc_ref:   (tm, dim)   f32 scratch accumulator
    """
    k = pl.program_id(1)

    @pl.when(k == 0)
    def _():
        acc_ref[...] = jnp.zeros_like(acc_ref)

    h = lax.dot_general(
        x_ref[...], wfc_ref[...],
        dimension_numbers=(((1,), (1,)), ((), ())),
        preferred_element_type=jnp.float32)
    h = jnp.maximum(h, 0.0)
    h = h * h
    acc_ref[...] += lax.dot_general(
        h.astype(wproj_ref.dtype), wproj_ref[...],
        dimension_numbers=(((1,), (1,)), ((), ())),
        preferred_element_type=jnp.float32)

    @pl.when(k == pl.num_programs(1) - 1)
    def _():
        o_ref[...] = acc_ref[...].astype(o_ref.dtype)


# --------------------------------------------------------------------------------------
# Wrapper
# --------------------------------------------------------------------------------------

def _round_up(x, m):
    return (x + m - 1) // m * m


def mlp_forward(x, w_fc, w_proj, *, tm=None, tk=None,
                compute_dtype=jnp.bfloat16, force_stream=False):
    """Fused MLP forward.

    x:      (..., dim)
    w_fc:   (hdim, dim)   PyTorch layout (out_features, in_features)
    w_proj: (dim, hdim)   PyTorch layout
    """
    orig_shape = x.shape
    out_dtype = x.dtype
    dim = orig_shape[-1]
    hdim, dim_in = w_fc.shape
    assert dim_in == dim, "w_fc must be (hdim, dim)"
    assert w_proj.shape == (dim, hdim), "w_proj must be (dim, hdim)"

    x2d = x.reshape(-1, dim)
    M = x2d.shape[0]

    cbytes = jnp.dtype(compute_dtype).itemsize
    obytes = jnp.dtype(out_dtype).itemsize
    weight_bytes = 2 * dim * hdim * cbytes  # both matrices, one copy each

    # ---- row tile: MXU-friendly, >=2 parallel tiles when possible (v7x megacore) ----
    if tm is None:
        if M >= 1024:
            tm = 512
        elif M >= 512:
            tm = 256
        elif M >= 64:
            tm = _round_up((M + 1) // 2, 32)   # two row tiles
        else:
            tm = _round_up(max(M, 8), 32)
    tm = max(32, _round_up(tm, 32))            # 32 covers f32/bf16/int8 sublane packing
    Mp = _round_up(M, tm)

    # ---- hidden (reduction) tile for the streaming path: big, never 128 by default ----
    if tk is None:
        if hdim % 512 == 0:
            tk = 512
        elif hdim % 256 == 0:
            tk = 256
        elif hdim % 128 == 0:
            tk = 128
        else:
            tk = hdim
    assert hdim % tk == 0, f"hdim={hdim} must be divisible by tk={tk}"

    # ---- VMEM budgeting (conservative: assume double-buffering everywhere) ----
    def _resident_est(tm_):
        return (2 * tm_ * dim * cbytes          # x tile
                + 2 * tm_ * dim * obytes        # out tile
                + 2 * weight_bytes              # resident weights (2x safety margin)
                + tm_ * hdim * 4)               # f32 hidden activation

    def _stream_est(tm_, tk_):
        return (2 * tm_ * dim * cbytes
                + 2 * tm_ * dim * obytes
                + tm_ * dim * 4                 # f32 accumulator
                + 2 * 2 * dim * tk_ * cbytes    # streamed weight slices (double-buffered)
                + tm_ * tk_ * 4)                # f32 hidden slice

    use_resident = (not force_stream) and _resident_est(tm) <= 44 * 2**20

    if not use_resident:
        # Shrink tiles until the streamed working set fits comfortably (v7x: 64 MiB VMEM).
        while _stream_est(tm, tk) > 48 * 2**20 and tk > 128 and tk % 2 == 0:
            tk //= 2
        while _stream_est(tm, tk) > 48 * 2**20 and tm > 64:
            tm = max(64, _round_up(tm // 2, 32))
        Mp = _round_up(M, tm)

    est = _resident_est(tm) if use_resident else _stream_est(tm, tk)
    vmem_limit = int(min(max(32 * 2**20, est + 8 * 2**20), 60 * 2**20))

    # ---- prepare operands: bf16 streaming, zero-pad ragged row counts ----
    x2d = x2d.astype(compute_dtype)
    if Mp != M:
        x2d = jnp.pad(x2d, ((0, Mp - M), (0, 0)))
    wfc_c = w_fc.astype(compute_dtype)     # native (hdim, dim) layout, no transpose
    wproj_c = w_proj.astype(compute_dtype)  # native (dim, hdim) layout, no transpose

    flops = 4 * Mp * dim * hdim
    w_traffic = weight_bytes if use_resident else (Mp // tm) * weight_bytes
    cost = pl.CostEstimate(
        flops=flops,
        transcendentals=0,
        bytes_accessed=Mp * dim * (cbytes + obytes) + w_traffic)

    if use_resident:
        grid = (Mp // tm,)
        out2d = pl.pallas_call(
            _mlp_resident_kernel,
            out_shape=jax.ShapeDtypeStruct((Mp, dim), out_dtype),
            grid_spec=pltpu.PrefetchScalarGridSpec(
                num_scalar_prefetch=0,
                grid=grid,
                in_specs=[
                    pl.BlockSpec((tm, dim), lambda i: (i, 0)),
                    pl.BlockSpec((hdim, dim), lambda i: (0, 0)),   # VMEM-resident
                    pl.BlockSpec((dim, hdim), lambda i: (0, 0)),   # VMEM-resident
                ],
                out_specs=pl.BlockSpec((tm, dim), lambda i: (i, 0)),
            ),
            compiler_params=pltpu.CompilerParams(
                dimension_semantics=("parallel",),
                vmem_limit_bytes=vmem_limit),
            cost_estimate=cost,
        )(x2d, wfc_c, wproj_c)
    else:
        grid = (Mp // tm, hdim // tk)
        out2d = pl.pallas_call(
            _mlp_streamed_kernel,
            out_shape=jax.ShapeDtypeStruct((Mp, dim), out_dtype),
            grid_spec=pltpu.PrefetchScalarGridSpec(
                num_scalar_prefetch=0,
                grid=grid,
                in_specs=[
                    pl.BlockSpec((tm, dim), lambda i, k: (i, 0)),
                    pl.BlockSpec((tk, dim), lambda i, k: (k, 0)),
                    pl.BlockSpec((dim, tk), lambda i, k: (0, k)),
                ],
                out_specs=pl.BlockSpec((tm, dim), lambda i, k: (i, 0)),
                scratch_shapes=[pltpu.VMEM((tm, dim), jnp.float32)],
            ),
            compiler_params=pltpu.CompilerParams(
                dimension_semantics=("parallel", "arbitrary"),
                vmem_limit_bytes=vmem_limit),
            cost_estimate=cost,
        )(x2d, wfc_c, wproj_c)

    if Mp != M:
        out2d = out2d[:M]
    return out2d.reshape(orig_shape)


def mlp_reference(x, w_fc, w_proj):
    """Pure-f32 reference matching the PyTorch module's eval forward."""
    xf = x.astype(jnp.float32)
    h = xf @ w_fc.astype(jnp.float32).T
    h = jnp.maximum(h, 0.0)
    h = h * h
    y = h @ w_proj.astype(jnp.float32).T
    return y


if __name__ == "__main__":
    # Small but TPU-layout-friendly shapes: batch=2, seq=128, dim=128 -> hdim=512.
    # (M = 256 rows => two parallel row tiles, so both v7x TensorCores get work.)
    B, T, dim = 2, 128, 128
    hdim = 4 * dim

    key = jax.random.PRNGKey(0)
    kx, k1, k2 = jax.random.split(key, 3)

    x = jax.random.normal(kx, (B, T, dim), dtype=jnp.float32)

    # Same init scheme as CastedLinear.reset_parameters (uniform(-bound, bound)).
    bound_fc = (3.0 ** 0.5) * 0.5 * dim ** (-0.5)
    w_fc = jax.random.uniform(k1, (hdim, dim), jnp.float32, -bound_fc, bound_fc)
    # NOTE: the PyTorch module zero-initializes c_proj.weight (output would be all
    # zeros); use random weights here so the correctness check is non-trivial.
    bound_pr = (3.0 ** 0.5) * 0.5 * hdim ** (-0.5)
    w_proj = jax.random.uniform(k2, (dim, hdim), jnp.float32, -bound_pr, bound_pr)

    ref = mlp_reference(x, w_fc, w_proj)

    # Fast path: weights fully VMEM-resident (the nanoGPT-scale configuration).
    out = jax.block_until_ready(mlp_forward(x, w_fc, w_proj))
    assert out.shape == x.shape and out.dtype == x.dtype
    assert jnp.allclose(out.astype(jnp.float32), ref, atol=2e-2, rtol=2e-2), \
        "resident path mismatch"

    # Fallback path: hidden-dim streaming (used when weights exceed the VMEM budget).
    out_s = jax.block_until_ready(
        mlp_forward(x, w_fc, w_proj, force_stream=True, tk=256))
    assert out_s.shape == x.shape and out_s.dtype == x.dtype
    assert jnp.allclose(out_s.astype(jnp.float32), ref, atol=2e-2, rtol=2e-2), \
        "streamed path mismatch"

    # TODO(synk): the fp8 training path (torch.ops.nanogpt.mm with x_s/w_s/grad_s
    # scaling) has no direct equivalent here; this kernel implements the standard
    # (use_fp8=False / eval) forward path in bf16-compute / f32-accumulate.
    print("KERNEL_OK")
</pallas_src>

<mosaic_0001>
module attributes {stable_mosaic.version = 11 : i64} {
  func.func @_mlp_resident_kernel(%arg0: i32, %arg1: memref<128x128xbf16, #tpu.memory_space<vmem>>, %arg2: memref<512x128xbf16, #tpu.memory_space<vmem>>, %arg3: memref<128x512xbf16, #tpu.memory_space<vmem>>, %arg4: memref<128x128xf32, #tpu.memory_space<vmem>>) attributes {dimension_semantics = [#tpu.dimension_semantics<parallel>], iteration_bounds = array<i64: 2>, scalar_prefetch = 0 : i64, scratch_operands = 0 : i64, tpu.core_type = #tpu.core_type<tc>, window_params = [{transform_indices = @transform_0, window_bounds = array<i64: 128, 128>}, {pipeline_mode = #tpu.pipeline_mode<synchronous>, transform_indices = @transform_1, window_bounds = array<i64: 512, 128>}, {pipeline_mode = #tpu.pipeline_mode<synchronous>, transform_indices = @transform_2, window_bounds = array<i64: 128, 512>}, {transform_indices = @transform_3, window_bounds = array<i64: 128, 128>}]} {
    %c0 = arith.constant 0 : index
    %c0_0 = arith.constant 0 : index
    %0 = vector.load %arg1[%c0, %c0_0] : memref<128x128xbf16, #tpu.memory_space<vmem>>, vector<128x128xbf16>
    %c0_1 = arith.constant 0 : index
    %c0_2 = arith.constant 0 : index
    %1 = vector.load %arg2[%c0_1, %c0_2] : memref<512x128xbf16, #tpu.memory_space<vmem>>, vector<512x128xbf16>
    %cst = arith.constant dense<0.000000e+00> : vector<128x512xf32>
    %2 = tpu.matmul %0, %1, %cst {dimension_numbers = #tpu.dot_dimension_numbers<[1], [1], [0], [0], [0, 0, 1, 0], [], []>} : vector<128x128xbf16>, vector<512x128xbf16>, vector<128x512xf32> -> vector<128x512xf32>
    %cst_3 = arith.constant 0.000000e+00 : f32
    %3 = vector.broadcast %cst_3 : f32 to vector<128x512xf32>
    %4 = arith.maximumf %2, %3 : vector<128x512xf32>
    %5 = arith.mulf %4, %4 : vector<128x512xf32>
    %6 = arith.truncf %5 : vector<128x512xf32> to vector<128x512xbf16>
    %c0_4 = arith.constant 0 : index
    %c0_5 = arith.constant 0 : index
    %7 = vector.load %arg3[%c0_4, %c0_5] : memref<128x512xbf16, #tpu.memory_space<vmem>>, vector<128x512xbf16>
    %cst_6 = arith.constant dense<0.000000e+00> : vector<128x128xf32>
    %8 = tpu.matmul %6, %7, %cst_6 {dimension_numbers = #tpu.dot_dimension_numbers<[1], [1], [0], [0], [0, 0, 1, 0], [], []>} : vector<128x512xbf16>, vector<128x512xbf16>, vector<128x128xf32> -> vector<128x128xf32>
    %c0_7 = arith.constant 0 : index
    %c0_8 = arith.constant 0 : index
    %9 = vector.load %arg4[%c0_7, %c0_8] : memref<128x128xf32, #tpu.memory_space<vmem>>, vector<128x128xf32>
    tpu.vector_store %arg4[%c0_7, %c0_8], %8 {strides = array<i32>} : memref<128x128xf32, #tpu.memory_space<vmem>>, vector<128x128xf32>,
    return
  }
  func.func @transform_0(%arg0: i32) -> (i32, i32) {
    %c0_i32 = arith.constant 0 : i32
    %c0_i32_0 = arith.constant 0 : i32
    return %arg0, %c0_i32 : i32, i32
  }
  func.func @transform_1(%arg0: i32) -> (i32, i32) {
    %c0_i32 = arith.constant 0 : i32
    %c0_i32_0 = arith.constant 0 : i32
    %c0_i32_1 = arith.constant 0 : i32
    return %c0_i32, %c0_i32_0 : i32, i32
  }
  func.func @transform_2(%arg0: i32) -> (i32, i32) {
    %c0_i32 = arith.constant 0 : i32
    %c0_i32_0 = arith.constant 0 : i32
    %c0_i32_1 = arith.constant 0 : i32
    return %c0_i32, %c0_i32_0 : i32, i32
  }
  func.func @transform_3(%arg0: i32) -> (i32, i32) {
    %c0_i32 = arith.constant 0 : i32
    %c0_i32_0 = arith.constant 0 : i32
    return %arg0, %c0_i32 : i32, i32
  }
}

</mosaic_0001>

<llo_original>
// kernel: tpu_custom_call.1
$region0: #{tpu_custom_call.1}
  #allocation0 [shape = 'u32[]', space=smem, size = 0x4, offset = 0x4, fixed_abs, tag = 'smem constant byte address 0x4 - core index']
  #allocation1 [shape = 'u32[144,128]{1,0:T(1,128)}', space=vmem, size = 0x12000, scoped, tag = 'internal scratch']
  %s0 = inlined_call_operand.hbm [shape: bf16[256,128], index: 0, kind: input, shape index: {}]
  %s1 = inlined_call_operand.hbm [shape: bf16[512,128], index: 1, kind: input, shape index: {}]
  %s2 = inlined_call_operand.hbm [shape: bf16[128,512], index: 2, kind: input, shape index: {}]
  %s3 = inlined_call_operand.hbm [shape: f32[256,128], index: 3, kind: output, shape index: {}]
  %s4 = sld [smem:[#allocation0]]
  $region57: #{tpu_custom_call.1} parent=0
    _
  %s6 = ssub.s32 1, %s4
  %s7 = scalar_select 0, %s6, %s4
  $region1: #{tpu_custom_call.1} parent=0
    #allocation2 [shape = 'u8[65536]{0}', space=vmem, size = 0x10000, scoped, tag = 'input window, operand 0']
    #allocation3 [shape = 's32[2]{0}', space=sflag, size = 0x8, scoped, tag = 'scoped memory for tpu_custom_call.1']
    #allocation4 [shape = 's32[2]{0}', space=sflag, size = 0x8, scoped, tag = 'scoped memory for tpu_custom_call.1']
    #allocation5 [shape = 'u8[131072]{0}', space=vmem, size = 0x20000, scoped, tag = 'input window, operand 1, single buffered']
    #allocation6 [shape = 's32[1]{0}', space=sflag, size = 0x4, scoped, tag = 'scoped memory for tpu_custom_call.1']
    #allocation7 [shape = 'u8[131072]{0}', space=vmem, size = 0x20000, scoped, tag = 'input window, operand 2, single buffered']
    #allocation8 [shape = 'u8[131072]{0}', space=vmem, size = 0x20000, scoped, tag = 'output window, operand 0']
    %8 = vsyncpa [#allocation3], 0
    %s9 = scalar_lea.sflag [#allocation3], 1
    %10 = vsyncpa %s9, 0
    %11 = vsyncpa [#allocation6], 0
    %12 = vsyncpa [#allocation4], 0
    %s13 = scalar_lea.sflag [#allocation4], 1
    %14 = vsyncpa %s13, 0
    loop: start=0, step=1, limit=4
    $region2: #{tpu_custom_call.1} parent=1 // loop_pre_header
      _
    $region3: #{tpu_custom_call.1} parent=1 // loop_header
      %s16 = sphi 0, %s20
      %p17 = scmp.ge.s32.totalorder %s16, 4
      %s26 = sphi 0, %s28
      %s29 = sphi 0, %s26
      %s30 = sphi 0, %s29
      %s46 = sphi 0, %s30
      %s50 = sphi 0, %s50
      %s52 = sphi 0, %s50
      %s53 = sphi 0, %s52
      %s67 = sphi 0, %s53
      %s71 = sphi 0, %s71
      %s73 = sphi 0, %s71
      %s74 = sphi 0, %s73
      %s88 = sphi 0, %s74
      %s94 = sphi 0, %s96
      %s97 = sphi 0, %s94
      %s98 = sphi 0, %s97
      %s114 = sphi 0, %s98
    $region4: #{tpu_custom_call.1} parent=1 // loop_header_branch
      %19 = sbr.rel (%p17) target = $region8
    $region5: #{tpu_custom_call.1} parent=1 // loop_body
      %s21 = ssub.s32 %s16, 1
      %s22 = ssub.s32 %s16, 2
      %s23 = sadd.s32 %s16, 1
      %s24 = ssub.s32 %s16, %s23
      %p25 = scmp.eq.s32.totalorder %s24, 0
      %s27 = sadd.s32 %s26, 1
      %s28 = scalar_select %p25, %s26, %s27
      %p31 = pneg %p25
      %p32 = scmp.eq.s32.totalorder %s16, 1
      %p33 = por %p31, %p32
      %p34 = scmp.ne.s32.totalorder %s26, %s29
      %p35 = scmp.eq.s32.totalorder %s16, 0
      %p36 = por %p34, %p35
      %p37 = scmp.ne.s32.totalorder %s26, %s29
      %p38 = scmp.eq.s32.totalorder %s21, 1
      %p39 = por %p37, %p38
      %p40 = scmp.ne.s32.totalorder %s29, %s30
      %p41 = scmp.eq.s32.totalorder %s21, 0
      %p42 = por %p40, %p41
      %p43 = scmp.ne.s32.totalorder %s29, %s30
      %p44 = scmp.eq.s32.totalorder %s22, 1
      %p45 = por %p43, %p44
      %p47 = scmp.ne.s32.totalorder %s30, %s46
      %p48 = scmp.eq.s32.totalorder %s22, 0
      %p49 = por %p47, %p48
      %s51 = sadd.s32 %s50, 1
      %p54 = scmp.eq.s32.totalorder %s16, 1
      %p55 = scmp.ne.s32.totalorder %s50, %s52
      %p56 = scmp.eq.s32.totalorder %s16, 0
      %p57 = por %p55, %p56
      %p58 = scmp.ne.s32.totalorder %s50, %s52
      %p59 = scmp.eq.s32.totalorder %s21, 1
      %p60 = por %p58, %p59
      %p61 = scmp.ne.s32.totalorder %s52, %s53
      %p62 = scmp.eq.s32.totalorder %s21, 0
      %p63 = por %p61, %p62
      %p64 = scmp.ne.s32.totalorder %s52, %s53
      %p65 = scmp.eq.s32.totalorder %s22, 1
      %p66 = por %p64, %p65
      %p68 = scmp.ne.s32.totalorder %s53, %s67
      %p69 = scmp.eq.s32.totalorder %s22, 0
      %p70 = por %p68, %p69
      %s72 = sadd.s32 %s71, 1
      %p75 = scmp.eq.s32.totalorder %s16, 1
      %p76 = scmp.ne.s32.totalorder %s71, %s73
      %p77 = scmp.eq.s32.totalorder %s16, 0
      %p78 = por %p76, %p77
      %p79 = scmp.ne.s32.totalorder %s71, %s73
      %p80 = scmp.eq.s32.totalorder %s21, 1
      %p81 = por %p79, %p80
      %p82 = scmp.ne.s32.totalorder %s73, %s74
      %p83 = scmp.eq.s32.totalorder %s21, 0
      %p84 = por %p82, %p83
      %p85 = scmp.ne.s32.totalorder %s73, %s74
      %p86 = scmp.eq.s32.totalorder %s22, 1
      %p87 = por %p85, %p86
      %p89 = scmp.ne.s32.totalorder %s74, %s88
      %p90 = scmp.eq.s32.totalorder %s22, 0
      %p91 = por %p89, %p90
      %s92 = ssub.s32 %s16, %s23
      %p93 = scmp.eq.s32.totalorder %s92, 0
      %s95 = sadd.s32 %s94, 1
      %s96 = scalar_select %p93, %s94, %s95
      %p99 = pneg %p93
      %p100 = scmp.eq.s32.totalorder %s16, 1
      %p101 = por %p99, %p100
      %p102 = scmp.ne.s32.totalorder %s94, %s97
      %p103 = scmp.eq.s32.totalorder %s16, 0
      %p104 = por %p102, %p103
      %p105 = scmp.ne.s32.totalorder %s94, %s97
      %p106 = scmp.eq.s32.totalorder %s21, 1
      %p107 = por %p105, %p106
      %p108 = scmp.ne.s32.totalorder %s97, %s98
      %p109 = scmp.eq.s32.totalorder %s21, 0
      %p110 = por %p108, %p109
      %p111 = scmp.ne.s32.totalorder %s97, %s98
      %p112 = scmp.eq.s32.totalorder %s22, 1
      %p113 = por %p111, %p112
      %p115 = scmp.ne.s32.totalorder %s98, %s114
      %p116 = scmp.eq.s32.totalorder %s22, 0
      %p117 = por %p115, %p116
      %p118 = scmp.le.s32.totalorder 1, %s16
      %p119 = scmp.lt.s32.totalorder %s16, 3
      %p120 = pnand %p118, %p119
      %p121 = pneg %p120
      // Predicated region
      $region9: #{tpu_custom_call.1} parent=5 // pred_check
        _
      $region10: #{tpu_custom_call.1} parent=5 // pred_check_branch
        %123 = sbr.rel (%p120) target = $region12
      $region11: #{tpu_custom_call.1} parent=5 // pred_region
        %s124 = ssub.s32 %s16, 1
        // Predicated region
        $region13: #{tpu_custom_call.1} parent=11 // pred_check
          %p125 = pneg %p63
        $region14: #{tpu_custom_call.1} parent=11 // pred_check_branch
          %127 = sbr.rel (%p125) target = $region16
        $region15: #{tpu_custom_call.1} parent=11 // pred_region
          %s129 = ssub.s32 4096, 4096
          %130 = vsyncadd [#allocation6], %s129
          %s131 = sshll.u32 [#allocation5], 4
          %s132 = int_to_ptr.vmem [resolvable:$true] %s131
          %137 = dma.hbm_to_vmem [thread:$0]  %s1, 4096, %s132, [#allocation6], 64, 64, 4
        $region16: #{tpu_custom_call.1} parent=11 // pred_fallthru
          _
        // Predicated region
        $region17: #{tpu_custom_call.1} parent=11 // pred_check
          %p138 = pneg %p84
        $region18: #{tpu_custom_call.1} parent=11 // pred_check_branch
          %140 = sbr.rel (%p138) target = $region20
        $region19: #{tpu_custom_call.1} parent=11 // pred_region
          %s142 = ssub.s32 4096, 4096
          %143 = vsyncadd [#allocation6], %s142
          %s144 = sshll.u32 [#allocation7], 4
          %s145 = int_to_ptr.vmem [resolvable:$true] %s144
          %150 = dma.hbm_to_vmem [thread:$0]  %s2, 4096, %s145, [#allocation6], 256, 256, 16
        $region20: #{tpu_custom_call.1} parent=11 // pred_fallthru
          _
      $region12: #{tpu_custom_call.1} parent=5 // pred_fallthru
        _
      %p151 = scmp.lt.s32.totalorder %s16, 2
      // Predicated region
      $region21: #{tpu_custom_call.1} parent=5 // pred_check
        %p152 = pneg %p151
      $region22: #{tpu_custom_call.1} parent=5 // pred_check_branch
        %154 = sbr.rel (%p152) target = $region24
      $region23: #{tpu_custom_call.1} parent=5 // pred_region
        // Predicated region
        $region25: #{tpu_custom_call.1} parent=23 // pred_check
          %p155 = pneg %p36
        $region26: #{tpu_custom_call.1} parent=23 // pred_check_branch
          %157 = sbr.rel (%p155) target = $region28
        $region27: #{tpu_custom_call.1} parent=23 // pred_region
          %s158 = sand.u32 %s26, 1
          %s159 = scalar_lea.sflag [#allocation3], %s158
          %s160 = sand.u32 %s26, 1
          %s161 = smul.addr %s160, 64
          %s162 = scalar_lea.vmem [#allocation2], %s161
          %s163 = smul.u32 16, %s16
          %s165 = ssub.s32 1024, 1024
          %166 = vsyncadd %s159, %s165
          %s167 = smul.addr %s163, 64
          %s168 = scalar_lea.hbm %s0, %s167
          %s169 = sshll.u32 %s162, 4
          %s170 = int_to_ptr.vmem [resolvable:$true] %s169
          %175 = dma.hbm_to_vmem [thread:$0]  %s168, 1024, %s170, %s159, 64, 64, 4
        $region28: #{tpu_custom_call.1} parent=23 // pred_fallthru
          _
      $region24: #{tpu_custom_call.1} parent=5 // pred_fallthru
        _
      %p176 = scmp.le.s32.totalorder 1, %s16
      %p177 = scmp.lt.s32.totalorder %s16, 3
      %p178 = pnand %p176, %p177
      %p179 = pneg %p178
      // Predicated region
      $region29: #{tpu_custom_call.1} parent=5 // pred_check
        _
      $region30: #{tpu_custom_call.1} parent=5 // pred_check_branch
        %181 = sbr.rel (%p178) target = $region32
      $region31: #{tpu_custom_call.1} parent=5 // pred_region
        %s182 = ssub.s32 %s16, 1
        %s183 = sand.u32 %s29, 1
        %s184 = scalar_lea.sflag [#allocation3], %s183
        %s185 = sand.u32 %s29, 1
        %s186 = smul.addr %s185, 64
        %s187 = scalar_lea.vmem [#allocation2], %s186
        // Predicated region
        $region33: #{tpu_custom_call.1} parent=31 // pred_check
          %p188 = pneg %p42
        $region34: #{tpu_custom_call.1} parent=31 // pred_check_branch
          %190 = sbr.rel (%p188) target = $region36
        $region35: #{tpu_custom_call.1} parent=31 // pred_region
          %191 = dma.done %s184, 1024
        $region36: #{tpu_custom_call.1} parent=31 // pred_fallthru
          _
        // Predicated region
        $region37: #{tpu_custom_call.1} parent=31 // pred_check
          %p192 = pneg %p63
        $region38: #{tpu_custom_call.1} parent=31 // pred_check_branch
          %194 = sbr.rel (%p192) target = $region40
        $region39: #{tpu_custom_call.1} parent=31 // pred_region
          %195 = dma.done [#allocation6], 4096
        $region40: #{tpu_custom_call.1} parent=31 // pred_fallthru
          _
        // Predicated region
        $region41: #{tpu_custom_call.1} parent=31 // pred_check
          %p196 = pneg %p84
        $region42: #{tpu_custom_call.1} parent=31 // pred_check_branch
          %198 = sbr.rel (%p196) target = $region44
        $region43: #{tpu_custom_call.1} parent=31 // pred_region
          %199 = dma.done [#allocation6], 4096
        $region44: #{tpu_custom_call.1} parent=31 // pred_fallthru
          _
        %s200 = sand.u32 %s29, 1
        %s201 = scalar_lea.sflag [#allocation3], %s200
        %s202 = sand.u32 %s29, 1
        %s203 = smul.addr %s202, 64
        %s204 = scalar_lea.vmem [#allocation2], %s203
        %p205 = pneg %p42
        %p206 = pneg %p39
        %p207 = pneg %p63
        %p208 = pneg %p60
        %p209 = pneg %p84
        %p210 = pneg %p81
        %p211 = pneg %p110
        %p212 = pneg %p107
        %s213 = sand.u32 %s97, 1
        %s214 = scalar_lea.sflag [#allocation4], %s213
        %s215 = sand.u32 %s97, 1
        %s216 = smul.addr %s215, 128
        %s217 = scalar_lea.vmem [#allocation8], %s216
        %s218 = smul.u32 16, %s21
        %s219 = smul.u32 16, %s21
        %v221 = vld [vmem:[%s187] sm:$0xf]
        %v222 = vld [vmem:[%s187 + $0x4] sm:$0xf]
        %v223 = vld [vmem:[%s187 + $0x8] sm:$0xf]
        %v224 = vld [vmem:[%s187 + $0xc] sm:$0xf]
        %v225 = vld [vmem:[%s187 + $0x10] sm:$0xf]
        %v226 = vld [vmem:[%s187 + $0x14] sm:$0xf]
        %v227 = vld [vmem:[%s187 + $0x18] sm:$0xf]
        %v228 = vld [vmem:[%s187 + $0x1c] sm:$0xf]
        %v229 = vld [vmem:[%s187 + $0x20] sm:$0xf]
        %v230 = vld [vmem:[%s187 + $0x24] sm:$0xf]
        %v231 = vld [vmem:[%s187 + $0x28] sm:$0xf]
        %v232 = vld [vmem:[%s187 + $0x2c] sm:$0xf]
        %v233 = vld [vmem:[%s187 + $0x30] sm:$0xf]
        %v234 = vld [vmem:[%s187 + $0x34] sm:$0xf]
        %v235 = vld [vmem:[%s187 + $0x38] sm:$0xf]
        %v236 = vld [vmem:[%s187 + $0x3c] sm:$0xf]
        %v237 = vld [vmem:[#allocation5] sm:$0xf]
        %v238 = vld [vmem:[#allocation5 + $0x4] sm:$0xf]
        %v239 = vld [vmem:[#allocation5 + $0x8] sm:$0xf]
        %v240 = vld [vmem:[#allocation5 + $0xc] sm:$0xf]
        %v241 = vld [vmem:[#allocation5 + $0x10] sm:$0xf]
        %v242 = vld [vmem:[#allocation5 + $0x14] sm:$0xf]
        %v243 = vld [vmem:[#allocation5 + $0x18] sm:$0xf]
        %v244 = vld [vmem:[#allocation5 + $0x1c] sm:$0xf]
        %v245 = vld [vmem:[#allocation5 + $0x20] sm:$0xf]
        %v246 = vld [vmem:[#allocation5 + $0x24] sm:$0xf]
        %v247 = vld [vmem:[#allocation5 + $0x28] sm:$0xf]
        %v248 = vld [vmem:[#allocation5 + $0x2c] sm:$0xf]
        %v249 = vld [vmem:[#allocation5 + $0x30] sm:$0xf]
        %v250 = vld [vmem:[#allocation5 + $0x34] sm:$0xf]
        %v251 = vld [vmem:[#allocation5 + $0x38] sm:$0xf]
        %v252 = vld [vmem:[#allocation5 + $0x3c] sm:$0xf]
        %v253 = vld [vmem:[#allocation5 + $0x40] sm:$0xf]
        %v254 = vld [vmem:[#allocation5 + $0x44] sm:$0xf]
        %v255 = vld [vmem:[#allocation5 + $0x48] sm:$0xf]
        %v256 = vld [vmem:[#allocation5 + $0x4c] sm:$0xf]
        %v257 = vld [vmem:[#allocation5 + $0x50] sm:$0xf]
        %v258 = vld [vmem:[#allocation5 + $0x54] sm:$0xf]
        %v259 = vld [vmem:[#allocation5 + $0x58] sm:$0xf]
        %v260 = vld [vmem:[#allocation5 + $0x5c] sm:$0xf]
        %v261 = vld [vmem:[#allocation5 + $0x60] sm:$0xf]
        %v262 = vld [vmem:[#allocation5 + $0x64] sm:$0xf]
        %v263 = vld [vmem:[#allocation5 + $0x68] sm:$0xf]
        %v264 = vld [vmem:[#allocation5 + $0x6c] sm:$0xf]
        %v265 = vld [vmem:[#allocation5 + $0x70] sm:$0xf]
        %v266 = vld [vmem:[#allocation5 + $0x74] sm:$0xf]
        %v267 = vld [vmem:[#allocation5 + $0x78] sm:$0xf]
        %v268 = vld [vmem:[#allocation5 + $0x7c] sm:$0xf]
        %v269 = vld [vmem:[#allocation5 + $0x80] sm:$0xf]
        %v270 = vld [vmem:[#allocation5 + $0x84] sm:$0xf]
        %v271 = vld [vmem:[#allocation5 + $0x88] sm:$0xf]
        %v272 = vld [vmem:[#allocation5 + $0x8c] sm:$0xf]
        %v273 = vld [vmem:[#allocation5 + $0x90] sm:$0xf]
        %v274 = vld [vmem:[#allocation5 + $0x94] sm:$0xf]
        %v275 = vld [vmem:[#allocation5 + $0x98] sm:$0xf]
        %v276 = vld [vmem:[#allocation5 + $0x9c] sm:$0xf]
        %v277 = vld [vmem:[#allocation5 + $0xa0] sm:$0xf]
        %v278 = vld [vmem:[#allocation5 + $0xa4] sm:$0xf]
        %v279 = vld [vmem:[#allocation5 + $0xa8] sm:$0xf]
        %v280 = vld [vmem:[#allocation5 + $0xac] sm:$0xf]
        %v281 = vld [vmem:[#allocation5 + $0xb0] sm:$0xf]
        %v282 = vld [vmem:[#allocation5 + $0xb4] sm:$0xf]
        %v283 = vld [vmem:[#allocation5 + $0xb8] sm:$0xf]
        %v284 = vld [vmem:[#allocation5 + $0xbc] sm:$0xf]
        %v285 = vld [vmem:[#allocation5 + $0xc0] sm:$0xf]
        %v286 = vld [vmem:[#allocation5 + $0xc4] sm:$0xf]
        %v287 = vld [vmem:[#allocation5 + $0xc8] sm:$0xf]
        %v288 = vld [vmem:[#allocation5 + $0xcc] sm:$0xf]
        %v289 = vld [vmem:[#allocation5 + $0xd0] sm:$0xf]
        %v290 = vld [vmem:[#allocation5 + $0xd4] sm:$0xf]
        %v291 = vld [vmem:[#allocation5 + $0xd8] sm:$0xf]
        %v292 = vld [vmem:[#allocation5 + $0xdc] sm:$0xf]
        %v293 = vld [vmem:[#allocation5 + $0xe0] sm:$0xf]
        %v294 = vld [vmem:[#allocation5 + $0xe4] sm:$0xf]
        %v295 = vld [vmem:[#allocation5 + $0xe8] sm:$0xf]
        %v296 = vld [vmem:[#allocation5 + $0xec] sm:$0xf]
        %v297 = vld [vmem:[#allocation5 + $0xf0] sm:$0xf]
        %v298 = vld [vmem:[#allocation5 + $0xf4] sm:$0xf]
        %v299 = vld [vmem:[#allocation5 + $0xf8] sm:$0xf]
        %v300 = vld [vmem:[#allocation5 + $0xfc] sm:$0xf]
        %v317 = vunpack.c.l.b16 %v221
        %v318 = vunpack.c.l.b16 %v222
        %v319 = vunpack.c.l.b16 %v223
        %v320 = vunpack.c.l.b16 %v224
        %v321 = vunpack.c.l.b16 %v225
        %v322 = vunpack.c.l.b16 %v226
        %v323 = vunpack.c.l.b16 %v227
        %v324 = vunpack.c.l.b16 %v228
        %v325 = vunpack.c.l.b16 %v229
        %v326 = vunpack.c.l.b16 %v230
        %v327 = vunpack.c.l.b16 %v231
        %v328 = vunpack.c.l.b16 %v232
        %v329 = vunpack.c.l.b16 %v233
        %v330 = vunpack.c.l.b16 %v234
        %v331 = vunpack.c.l.b16 %v235
        %v332 = vunpack.c.l.b16 %v236
        %v333 = vpack.c.b16 %v318, %v317
        %v334 = vpack.c.b16 %v320, %v319
        %v335 = vpack.c.b16 %v322, %v321
        %v336 = vpack.c.b16 %v324, %v323
        %v337 = vpack.c.b16 %v326, %v325
        %v338 = vpack.c.b16 %v328, %v327
        %v339 = vpack.c.b16 %v330, %v329
        %v340 = vpack.c.b16 %v332, %v331
        %v413 = vunpack.c.l.b16 %v237
        %v414 = vunpack.c.l.b16 %v238
        %v415 = vunpack.c.l.b16 %v239
        %v416 = vunpack.c.l.b16 %v240
        %v417 = vunpack.c.l.b16 %v241
        %v418 = vunpack.c.l.b16 %v242
        %v419 = vunpack.c.l.b16 %v243
        %v420 = vunpack.c.l.b16 %v244
        %v421 = vunpack.c.l.b16 %v245
        %v422 = vunpack.c.l.b16 %v246
        %v423 = vunpack.c.l.b16 %v247
        %v424 = vunpack.c.l.b16 %v248
        %v425 = vunpack.c.l.b16 %v249
        %v426 = vunpack.c.l.b16 %v250
        %v427 = vunpack.c.l.b16 %v251
        %v428 = vunpack.c.l.b16 %v252
        %v429 = vunpack.c.l.b16 %v253
        %v430 = vunpack.c.l.b16 %v254
        %v431 = vunpack.c.l.b16 %v255
        %v432 = vunpack.c.l.b16 %v256
        %v433 = vunpack.c.l.b16 %v257
        %v434 = vunpack.c.l.b16 %v258
        %v435 = vunpack.c.l.b16 %v259
        %v436 = vunpack.c.l.b16 %v260
        %v437 = vunpack.c.l.b16 %v261
        %v438 = vunpack.c.l.b16 %v262
        %v439 = vunpack.c.l.b16 %v263
        %v440 = vunpack.c.l.b16 %v264
        %v441 = vunpack.c.l.b16 %v265
        %v442 = vunpack.c.l.b16 %v266
        %v443 = vunpack.c.l.b16 %v267
        %v444 = vunpack.c.l.b16 %v268
        %v445 = vunpack.c.l.b16 %v269
        %v446 = vunpack.c.l.b16 %v270
        %v447 = vunpack.c.l.b16 %v271
        %v448 = vunpack.c.l.b16 %v272
        %v449 = vunpack.c.l.b16 %v273
        %v450 = vunpack.c.l.b16 %v274
        %v451 = vunpack.c.l.b16 %v275
        %v452 = vunpack.c.l.b16 %v276
        %v453 = vunpack.c.l.b16 %v277
        %v454 = vunpack.c.l.b16 %v278
        %v455 = vunpack.c.l.b16 %v279
        %v456 = vunpack.c.l.b16 %v280
        %v457 = vunpack.c.l.b16 %v281
        %v458 = vunpack.c.l.b16 %v282
        %v459 = vunpack.c.l.b16 %v283
        %v460 = vunpack.c.l.b16 %v284
        %v461 = vunpack.c.l.b16 %v285
        %v462 = vunpack.c.l.b16 %v286
        %v463 = vunpack.c.l.b16 %v287
        %v464 = vunpack.c.l.b16 %v288
        %v465 = vunpack.c.l.b16 %v289
        %v466 = vunpack.c.l.b16 %v290
        %v467 = vunpack.c.l.b16 %v291
        %v468 = vunpack.c.l.b16 %v292
        %v469 = vunpack.c.l.b16 %v293
        %v470 = vunpack.c.l.b16 %v294
        %v471 = vunpack.c.l.b16 %v295
        %v472 = vunpack.c.l.b16 %v296
        %v473 = vunpack.c.l.b16 %v297
        %v474 = vunpack.c.l.b16 %v298
        %v475 = vunpack.c.l.b16 %v299
        %v476 = vunpack.c.l.b16 %v300
        %v477 = vpack.c.b16 %v414, %v413
        %v478 = vpack.c.b16 %v416, %v415
        %v479 = vpack.c.b16 %v418, %v417
        %v480 = vpack.c.b16 %v420, %v419
        %v481 = vpack.c.b16 %v422, %v421
        %v482 = vpack.c.b16 %v424, %v423
        %v483 = vpack.c.b16 %v426, %v425
        %v484 = vpack.c.b16 %v428, %v427
        %v485 = vpack.c.b16 %v430, %v429
        %v486 = vpack.c.b16 %v432, %v431
        %v487 = vpack.c.b16 %v434, %v433
        %v488 = vpack.c.b16 %v436, %v435
        %v489 = vpack.c.b16 %v438, %v437
        %v490 = vpack.c.b16 %v440, %v439
        %v491 = vpack.c.b16 %v442, %v441
        %v492 = vpack.c.b16 %v444, %v443
        %v493 = vpack.c.b16 %v446, %v445
        %v494 = vpack.c.b16 %v448, %v447
        %v495 = vpack.c.b16 %v450, %v449
        %v496 = vpack.c.b16 %v452, %v451
        %v497 = vpack.c.b16 %v454, %v453
        %v498 = vpack.c.b16 %v456, %v455
        %v499 = vpack.c.b16 %v458, %v457
        %v500 = vpack.c.b16 %v460, %v459
        %v501 = vpack.c.b16 %v462, %v461
        %v502 = vpack.c.b16 %v464, %v463
        %v503 = vpack.c.b16 %v466, %v465
        %v504 = vpack.c.b16 %v468, %v467
        %v505 = vpack.c.b16 %v470, %v469
        %v506 = vpack.c.b16 %v472, %v471
        %v507 = vpack.c.b16 %v474, %v473
        %v508 = vpack.c.b16 %v476, %v475
        %541 = vmatprep.subr.bf16.mxu0 0
        %542 = vmatpush1.bf16.xpose.msra.mxu0 %v477
        %543 = vmatprep.subr.bf16.mxu0 0
        %544 = vmatpush1.bf16.xpose.msra.mxu0 %v478
        %545 = vmatprep.subr.bf16.mxu0 0
        %546 = vmatpush1.bf16.xpose.msra.mxu0 %v479
        %547 = vmatprep.subr.bf16.mxu0 0
        %548 = vmatpush1.bf16.xpose.msra.mxu0 %v480
        %549 = vmatprep.subr.bf16.mxu0 0
        %550 = vmatpush1.bf16.xpose.msra.mxu0 %v481
        %551 = vmatprep.subr.bf16.mxu0 0
        %552 = vmatpush1.bf16.xpose.msra.mxu0 %v482
        %553 = vmatprep.subr.bf16.mxu0 0
        %554 = vmatpush1.bf16.xpose.msra.mxu0 %v483
        %555 = vmatprep.subr.bf16.mxu0 0
        %556 = vmatpush1.bf16.xpose.msra.mxu0 %v484
        %557 = vmatprep.subr.bf16.mxu0 0
        %558 = vmatpush1.bf16.xpose.msra.mxu0 %v485
        %559 = vmatprep.subr.bf16.mxu0 0
        %560 = vmatpush1.bf16.xpose.msra.mxu0 %v486
        %561 = vmatprep.subr.bf16.mxu0 0
        %562 = vmatpush1.bf16.xpose.msra.mxu0 %v487
        %563 = vmatprep.subr.bf16.mxu0 0
        %564 = vmatpush1.bf16.xpose.msra.mxu0 %v488
        %565 = vmatprep.subr.bf16.mxu0 0
        %566 = vmatpush1.bf16.xpose.msra.mxu0 %v489
        %567 = vmatprep.subr.bf16.mxu0 0
        %568 = vmatpush1.bf16.xpose.msra.mxu0 %v490
        %569 = vmatprep.subr.bf16.mxu0 0
        %570 = vmatpush1.bf16.xpose.msra.mxu0 %v491
        %571 = vmatprep.subr.bf16.mxu0 0
        %572 = vmatpush1.bf16.xpose.msra.mxu0 %v492
        %573 = vmatprep.mubr.bf16.mxu0 0
        %574 = vmatmul.mubr.bf16.gmra.mrb[0].mxu0 %v333
        %v575 = vpop.f32.mrb[0].mxu0
        %v576 = vadd.f32 0.0, %v575
        %v577 = vpop.f32.mrb[0].mxu0
        %v578 = vadd.f32 0.0, %v577
        %v579 = vpop.f32.mrb[0].mxu0
        %v580 = vadd.f32 0.0, %v579
        %v581 = vpop.f32.mrb[0].mxu0
        %v582 = vadd.f32 0.0, %v581
        %583 = vmatprep.mubr.bf16.mxu0 0
        %584 = vmatmul.mubr.bf16.gmra.mrb[0].mxu0 %v334
        %v585 = vpop.f32.mrb[0].mxu0
        %v586 = vadd.f32 0.0, %v585
        %v587 = vpop.f32.mrb[0].mxu0
        %v588 = vadd.f32 0.0, %v587
        %v589 = vpop.f32.mrb[0].mxu0
        %v590 = vadd.f32 0.0, %v589
        %v591 = vpop.f32.mrb[0].mxu0
        %v592 = vadd.f32 0.0, %v591
        %593 = vmatprep.mubr.bf16.mxu0 0
        %594 = vmatmul.mubr.bf16.gmra.mrb[0].mxu0 %v335
        %v595 = vpop.f32.mrb[0].mxu0
        %v596 = vadd.f32 0.0, %v595
        %v597 = vpop.f32.mrb[0].mxu0
        %v598 = vadd.f32 0.0, %v597
        %v599 = vpop.f32.mrb[0].mxu0
        %v600 = vadd.f32 0.0, %v599
        %v601 = vpop.f32.mrb[0].mxu0
        %v602 = vadd.f32 0.0, %v601
        %603 = vmatprep.mubr.bf16.mxu0 0
        %604 = vmatmul.mubr.bf16.gmra.mrb[0].mxu0 %v336
        %v605 = vpop.f32.mrb[0].mxu0
        %v606 = vadd.f32 0.0, %v605
        %v607 = vpop.f32.mrb[0].mxu0
        %v608 = vadd.f32 0.0, %v607
        %v609 = vpop.f32.mrb[0].mxu0
        %v610 = vadd.f32 0.0, %v609
        %v611 = vpop.f32.mrb[0].mxu0
        %v612 = vadd.f32 0.0, %v611
        %613 = vmatprep.mubr.bf16.mxu0 0
        %614 = vmatmul.mubr.bf16.gmra.mrb[0].mxu0 %v337
        %v615 = vpop.f32.mrb[0].mxu0
        %v616 = vadd.f32 0.0, %v615
        %v617 = vpop.f32.mrb[0].mxu0
        %v618 = vadd.f32 0.0, %v617
        %v619 = vpop.f32.mrb[0].mxu0
        %v620 = vadd.f32 0.0, %v619
        %v621 = vpop.f32.mrb[0].mxu0
        %v622 = vadd.f32 0.0, %v621
        %623 = vmatprep.mubr.bf16.mxu0 0
        %624 = vmatmul.mubr.bf16.gmra.mrb[0].mxu0 %v338
        %v625 = vpop.f32.mrb[0].mxu0
        %v626 = vadd.f32 0.0, %v625
        %v627 = vpop.f32.mrb[0].mxu0
        %v628 = vadd.f32 0.0, %v627
        %v629 = vpop.f32.mrb[0].mxu0
        %v630 = vadd.f32 0.0, %v629
        %v631 = vpop.f32.mrb[0].mxu0
        %v632 = vadd.f32 0.0, %v631
        %633 = vmatprep.mubr.bf16.mxu0 0
        %634 = vmatmul.mubr.bf16.gmra.mrb[0].mxu0 %v339
        %v635 = vpop.f32.mrb[0].mxu0
        %v636 = vadd.f32 0.0, %v635
        %v637 = vpop.f32.mrb[0].mxu0
        %v638 = vadd.f32 0.0, %v637
        %v639 = vpop.f32.mrb[0].mxu0
        %v640 = vadd.f32 0.0, %v639
        %v641 = vpop.f32.mrb[0].mxu0
        %v642 = vadd.f32 0.0, %v641
        %643 = vmatprep.mubr.bf16.mxu0 0
        %644 = vmatmul.mubr.bf16.gmra.mrb[0].mxu0 %v340
        %v645 = vpop.f32.mrb[0].mxu0
        %v646 = vadd.f32 0.0, %v645
        %v647 = vpop.f32.mrb[0].mxu0
        %v648 = vadd.f32 0.0, %v647
        %v649 = vpop.f32.mrb[0].mxu0
        %v650 = vadd.f32 0.0, %v649
        %v651 = vpop.f32.mrb[0].mxu0
        %v652 = vadd.f32 0.0, %v651
        %653 = vdwg.mxu0
        %654 = vmatprep.subr.bf16.mxu0 0
        %655 = vmatpush1.bf16.xpose.msra.mxu0 %v493
        %656 = vmatprep.subr.bf16.mxu0 0
        %657 = vmatpush1.bf16.xpose.msra.mxu0 %v494
        %658 = vmatprep.subr.bf16.mxu0 0
        %659 = vmatpush1.bf16.xpose.msra.mxu0 %v495
        %660 = vmatprep.subr.bf16.mxu0 0
        %661 = vmatpush1.bf16.xpose.msra.mxu0 %v496
        %662 = vmatprep.subr.bf16.mxu0 0
        %663 = vmatpush1.bf16.xpose.msra.mxu0 %v497
        %664 = vmatprep.subr.bf16.mxu0 0
        %665 = vmatpush1.bf16.xpose.msra.mxu0 %v498
        %666 = vmatprep.subr.bf16.mxu0 0
        %667 = vmatpush1.bf16.xpose.msra.mxu0 %v499
        %668 = vmatprep.subr.bf16.mxu0 0
        %669 = vmatpush1.bf16.xpose.msra.mxu0 %v500
        %670 = vmatprep.subr.bf16.mxu0 0
        %671 = vmatpush1.bf16.xpose.msra.mxu0 %v501
        %672 = vmatprep.subr.bf16.mxu0 0
        %673 = vmatpush1.bf16.xpose.msra.mxu0 %v502
        %674 = vmatprep.subr.bf16.mxu0 0
        %675 = vmatpush1.bf16.xpose.msra.mxu0 %v503
        %676 = vmatprep.subr.bf16.mxu0 0
        %677 = vmatpush1.bf16.xpose.msra.mxu0 %v504
        %678 = vmatprep.subr.bf16.mxu0 0
        %679 = vmatpush1.bf16.xpose.msra.mxu0 %v505
        %680 = vmatprep.subr.bf16.mxu0 0
        %681 = vmatpush1.bf16.xpose.msra.mxu0 %v506
        %682 = vmatprep.subr.bf16.mxu0 0
        %683 = vmatpush1.bf16.xpose.msra.mxu0 %v507
        %684 = vmatprep.subr.bf16.mxu0 0
        %685 = vmatpush1.bf16.xpose.msra.mxu0 %v508
        %686 = vmatprep.mubr.bf16.mxu0 0
        %687 = vmatmul.mubr.bf16.gmra.mrb[0].mxu0 %v333
        %v688 = vpop.f32.mrb[0].mxu0
        %v689 = vadd.f32 0.0, %v688
        %v690 = vpop.f32.mrb[0].mxu0
        %v691 = vadd.f32 0.0, %v690
        %v692 = vpop.f32.mrb[0].mxu0
        %v693 = vadd.f32 0.0, %v692
        %v694 = vpop.f32.mrb[0].mxu0
        %v695 = vadd.f32 0.0, %v694
        %696 = vmatprep.mubr.bf16.mxu0 0
        %697 = vmatmul.mubr.bf16.gmra.mrb[0].mxu0 %v334
        %v698 = vpop.f32.mrb[0].mxu0
        %v699 = vadd.f32 0.0, %v698
        %v700 = vpop.f32.mrb[0].mxu0
        %v701 = vadd.f32 0.0, %v700
        %v702 = vpop.f32.mrb[0].mxu0
        %v703 = vadd.f32 0.0, %v702
        %v704 = vpop.f32.mrb[0].mxu0
        %v705 = vadd.f32 0.0, %v704
        %706 = vmatprep.mubr.bf16.mxu0 0
        %707 = vmatmul.mubr.bf16.gmra.mrb[0].mxu0 %v335
        %v708 = vpop.f32.mrb[0].mxu0
        %v709 = vadd.f32 0.0, %v708
        %v710 = vpop.f32.mrb[0].mxu0
        %v711 = vadd.f32 0.0, %v710
        %v712 = vpop.f32.mrb[0].mxu0
        %v713 = vadd.f32 0.0, %v712
        %v714 = vpop.f32.mrb[0].mxu0
        %v715 = vadd.f32 0.0, %v714
        %716 = vmatprep.mubr.bf16.mxu0 0
        %717 = vmatmul.mubr.bf16.gmra.mrb[0].mxu0 %v336
        %v718 = vpop.f32.mrb[0].mxu0
        %v719 = vadd.f32 0.0, %v718
        %v720 = vpop.f32.mrb[0].mxu0
        %v721 = vadd.f32 0.0, %v720
        %v722 = vpop.f32.mrb[0].mxu0
        %v723 = vadd.f32 0.0, %v722
        %v724 = vpop.f32.mrb[0].mxu0
        %v725 = vadd.f32 0.0, %v724
        %726 = vmatprep.mubr.bf16.mxu0 0
        %727 = vmatmul.mubr.bf16.gmra.mrb[0].mxu0 %v337
        %v728 = vpop.f32.mrb[0].mxu0
        %v729 = vadd.f32 0.0, %v728
        %v730 = vpop.f32.mrb[0].mxu0
        %v731 = vadd.f32 0.0, %v730
        %v732 = vpop.f32.mrb[0].mxu0
        %v733 = vadd.f32 0.0, %v732
        %v734 = vpop.f32.mrb[0].mxu0
        %v735 = vadd.f32 0.0, %v734
        %736 = vmatprep.mubr.bf16.mxu0 0
        %737 = vmatmul.mubr.bf16.gmra.mrb[0].mxu0 %v338
        %v738 = vpop.f32.mrb[0].mxu0
        %v739 = vadd.f32 0.0, %v738
        %v740 = vpop.f32.mrb[0].mxu0
        %v741 = vadd.f32 0.0, %v740
        %v742 = vpop.f32.mrb[0].mxu0
        %v743 = vadd.f32 0.0, %v742
        %v744 = vpop.f32.mrb[0].mxu0
        %v745 = vadd.f32 0.0, %v744
        %746 = vmatprep.mubr.bf16.mxu0 0
        %747 = vmatmul.mubr.bf16.gmra.mrb[0].mxu0 %v339
        %v748 = vpop.f32.mrb[0].mxu0
        %v749 = vadd.f32 0.0, %v748
        %v750 = vpop.f32.mrb[0].mxu0
        %v751 = vadd.f32 0.0, %v750
        %v752 = vpop.f32.mrb[0].mxu0
        %v753 = vadd.f32 0.0, %v752
        %v754 = vpop.f32.mrb[0].mxu0
        %v755 = vadd.f32 0.0, %v754
        %756 = vmatprep.mubr.bf16.mxu0 0
        %757 = vmatmul.mubr.bf16.gmra.mrb[0].mxu0 %v340
        %v758 = vpop.f32.mrb[0].mxu0
        %v759 = vadd.f32 0.0, %v758
        %v760 = vpop.f32.mrb[0].mxu0
        %v761 = vadd.f32 0.0, %v760
        %v762 = vpop.f32.mrb[0].mxu0
        %v763 = vadd.f32 0.0, %v762
        %v764 = vpop.f32.mrb[0].mxu0
        %v765 = vadd.f32 0.0, %v764
        %766 = vdwg.mxu0
        %v767 = vmax.f32 %v576, 0.0
        %v768 = vmax.f32 %v578, 0.0
        %v769 = vmax.f32 %v689, 0.0
        %v770 = vmax.f32 %v691, 0.0
        %v771 = vmax.f32 %v580, 0.0
        %v772 = vmax.f32 %v582, 0.0
        %v773 = vmax.f32 %v693, 0.0
        %v774 = vmax.f32 %v695, 0.0
        %v775 = vmax.f32 %v586, 0.0
        %v776 = vmax.f32 %v588, 0.0
        %v777 = vmax.f32 %v699, 0.0
        %v778 = vmax.f32 %v701, 0.0
        %v779 = vmax.f32 %v590, 0.0
        %v780 = vmax.f32 %v592, 0.0
        %v781 = vmax.f32 %v703, 0.0
        %v782 = vmax.f32 %v705, 0.0
        %v783 = vmax.f32 %v596, 0.0
        %v784 = vmax.f32 %v598, 0.0
        %v785 = vmax.f32 %v709, 0.0
        %v786 = vmax.f32 %v711, 0.0
        %v787 = vmax.f32 %v600, 0.0
        %v788 = vmax.f32 %v602, 0.0
        %v789 = vmax.f32 %v713, 0.0
        %v790 = vmax.f32 %v715, 0.0
        %v791 = vmax.f32 %v606, 0.0
        %v792 = vmax.f32 %v608, 0.0
        %v793 = vmax.f32 %v719, 0.0
        %v794 = vmax.f32 %v721, 0.0
        %v795 = vmax.f32 %v610, 0.0
        %v796 = vmax.f32 %v612, 0.0
        %v797 = vmax.f32 %v723, 0.0
        %v798 = vmax.f32 %v725, 0.0
        %v799 = vmax.f32 %v616, 0.0
        %v800 = vmax.f32 %v618, 0.0
        %v801 = vmax.f32 %v729, 0.0
        %v802 = vmax.f32 %v731, 0.0
        %v803 = vmax.f32 %v620, 0.0
        %v804 = vmax.f32 %v622, 0.0
        %v805 = vmax.f32 %v733, 0.0
        %v806 = vmax.f32 %v735, 0.0
        %v807 = vmax.f32 %v626, 0.0
        %v808 = vmax.f32 %v628, 0.0
        %v809 = vmax.f32 %v739, 0.0
        %v810 = vmax.f32 %v741, 0.0
        %v811 = vmax.f32 %v630, 0.0
        %v812 = vmax.f32 %v632, 0.0
        %v813 = vmax.f32 %v743, 0.0
        %v814 = vmax.f32 %v745, 0.0
        %v815 = vmax.f32 %v636, 0.0
        %v816 = vmax.f32 %v638, 0.0
        %v817 = vmax.f32 %v749, 0.0
        %v818 = vmax.f32 %v751, 0.0
        %v819 = vmax.f32 %v640, 0.0
        %v820 = vmax.f32 %v642, 0.0
        %v821 = vmax.f32 %v753, 0.0
        %v822 = vmax.f32 %v755, 0.0
        %v823 = vmax.f32 %v646, 0.0
        %v824 = vmax.f32 %v648, 0.0
        %v825 = vmax.f32 %v759, 0.0
        %v826 = vmax.f32 %v761, 0.0
        %v827 = vmax.f32 %v650, 0.0
        %v828 = vmax.f32 %v652, 0.0
        %v829 = vmax.f32 %v763, 0.0
        %v830 = vmax.f32 %v765, 0.0
        %v831 = vmul.f32 %v767, %v767
        %v832 = vmul.f32 %v768, %v768
        %v833 = vmul.f32 %v769, %v769
        %v834 = vmul.f32 %v770, %v770
        %v835 = vmul.f32 %v771, %v771
        %v836 = vmul.f32 %v772, %v772
        %v837 = vmul.f32 %v773, %v773
        %v838 = vmul.f32 %v774, %v774
        %v839 = vmul.f32 %v775, %v775
        %v840 = vmul.f32 %v776, %v776
        %v841 = vmul.f32 %v777, %v777
        %v842 = vmul.f32 %v778, %v778
        %v843 = vmul.f32 %v779, %v779
        %v844 = vmul.f32 %v780, %v780
        %v845 = vmul.f32 %v781, %v781
        %v846 = vmul.f32 %v782, %v782
        %v847 = vmul.f32 %v783, %v783
        %v848 = vmul.f32 %v784, %v784
        %v849 = vmul.f32 %v785, %v785
        %v850 = vmul.f32 %v786, %v786
        %v851 = vmul.f32 %v787, %v787
        %v852 = vmul.f32 %v788, %v788
        %v853 = vmul.f32 %v789, %v789
        %v854 = vmul.f32 %v790, %v790
        %v855 = vmul.f32 %v791, %v791
        %v856 = vmul.f32 %v792, %v792
        %v857 = vmul.f32 %v793, %v793
        %v858 = vmul.f32 %v794, %v794
        %v859 = vmul.f32 %v795, %v795
        %v860 = vmul.f32 %v796, %v796
        %v861 = vmul.f32 %v797, %v797
        %v862 = vmul.f32 %v798, %v798
        %v863 = vmul.f32 %v799, %v799
        %v864 = vmul.f32 %v800, %v800
        %v865 = vmul.f32 %v801, %v801
        %v866 = vmul.f32 %v802, %v802
        %v867 = vmul.f32 %v803, %v803
        %v868 = vmul.f32 %v804, %v804
        %v869 = vmul.f32 %v805, %v805
        %v870 = vmul.f32 %v806, %v806
        %v871 = vmul.f32 %v807, %v807
        %v872 = vmul.f32 %v808, %v808
        %v873 = vmul.f32 %v809, %v809
        %v874 = vmul.f32 %v810, %v810
        %v875 = vmul.f32 %v811, %v811
        %v876 = vmul.f32 %v812, %v812
        %v877 = vmul.f32 %v813, %v813
        %v878 = vmul.f32 %v814, %v814
        %v879 = vmul.f32 %v815, %v815
        %v880 = vmul.f32 %v816, %v816
        %v881 = vmul.f32 %v817, %v817
        %v882 = vmul.f32 %v818, %v818
        %v883 = vmul.f32 %v819, %v819
        %v884 = vmul.f32 %v820, %v820
        %v885 = vmul.f32 %v821, %v821
        %v886 = vmul.f32 %v822, %v822
        %v887 = vmul.f32 %v823, %v823
        %v888 = vmul.f32 %v824, %v824
        %v889 = vmul.f32 %v825, %v825
        %v890 = vmul.f32 %v826, %v826
        %v891 = vmul.f32 %v827, %v827
        %v892 = vmul.f32 %v828, %v828
        %v893 = vmul.f32 %v829, %v829
        %v894 = vmul.f32 %v830, %v830
        %v895 = vpack.c.bf16 %v835, %v831
        %v896 = vpack.c.bf16 %v836, %v832
        %v897 = vpack.c.bf16 %v837, %v833
        %v898 = vpack.c.bf16 %v838, %v834
        %v899 = vpack.c.bf16 %v843, %v839
        %v900 = vpack.c.bf16 %v844, %v840
        %v901 = vpack.c.bf16 %v845, %v841
        %v902 = vpack.c.bf16 %v846, %v842
        %v903 = vpack.c.bf16 %v851, %v847
        %v904 = vpack.c.bf16 %v852, %v848
        %v905 = vpack.c.bf16 %v853, %v849
        %v906 = vpack.c.bf16 %v854, %v850
        %v907 = vpack.c.bf16 %v859, %v855
        %v908 = vpack.c.bf16 %v860, %v856
        %v909 = vpack.c.bf16 %v861, %v857
        %v910 = vpack.c.bf16 %v862, %v858
        %v911 = vpack.c.bf16 %v867, %v863
        %v912 = vpack.c.bf16 %v868, %v864
        %v913 = vpack.c.bf16 %v869, %v865
        %v914 = vpack.c.bf16 %v870, %v866
        %v915 = vpack.c.bf16 %v875, %v871
        %v916 = vpack.c.bf16 %v876, %v872
        %v917 = vpack.c.bf16 %v877, %v873
        %v918 = vpack.c.bf16 %v878, %v874
        %v919 = vpack.c.bf16 %v883, %v879
        %v920 = vpack.c.bf16 %v884, %v880
        %v921 = vpack.c.bf16 %v885, %v881
        %v922 = vpack.c.bf16 %v886, %v882
        %v923 = vpack.c.bf16 %v891, %v887
        %v924 = vpack.c.bf16 %v892, %v888
        %v925 = vpack.c.bf16 %v893, %v889
        %v926 = vpack.c.bf16 %v894, %v890
        %v927 = vld [vmem:[#allocation7] sm:$0xff]
        %v928 = vld [vmem:[#allocation7 + $0x8] sm:$0xff]
        %v929 = vld [vmem:[#allocation7 + $0x10] sm:$0xff]
        %v930 = vld [vmem:[#allocation7 + $0x18] sm:$0xff]
        %v931 = vld [vmem:[#allocation7 + $0x20] sm:$0xff]
        %v932 = vld [vmem:[#allocation7 + $0x28] sm:$0xff]
        %v933 = vld [vmem:[#allocation7 + $0x30] sm:$0xff]
        %v934 = vld [vmem:[#allocation7 + $0x38] sm:$0xff]
        %v935 = vld [vmem:[#allocation7 + $0x40] sm:$0xff]
        %v936 = vld [vmem:[#allocation7 + $0x48] sm:$0xff]
        %v937 = vld [vmem:[#allocation7 + $0x50] sm:$0xff]
        %v938 = vld [vmem:[#allocation7 + $0x58] sm:$0xff]
        %v939 = vld [vmem:[#allocation7 + $0x60] sm:$0xff]
        %v940 = vld [vmem:[#allocation7 + $0x68] sm:$0xff]
        %v941 = vld [vmem:[#allocation7 + $0x70] sm:$0xff]
        %v942 = vld [vmem:[#allocation7 + $0x78] sm:$0xff]
        %v943 = vld [vmem:[#allocation7 + $0x80] sm:$0xff]
        %v944 = vld [vmem:[#allocation7 + $0x88] sm:$0xff]
        %v945 = vld [vmem:[#allocation7 + $0x90] sm:$0xff]
        %v946 = vld [vmem:[#allocation7 + $0x98] sm:$0xff]
        %v947 = vld [vmem:[#allocation7 + $0xa0] sm:$0xff]
        %v948 = vld [vmem:[#allocation7 + $0xa8] sm:$0xff]
        %v949 = vld [vmem:[#allocation7 + $0xb0] sm:$0xff]
        %v950 = vld [vmem:[#allocation7 + $0xb8] sm:$0xff]
        %v951 = vld [vmem:[#allocation7 + $0xc0] sm:$0xff]
        %v952 = vld [vmem:[#allocation7 + $0xc8] sm:$0xff]
        %v953 = vld [vmem:[#allocation7 + $0xd0] sm:$0xff]
        %v954 = vld [vmem:[#allocation7 + $0xd8] sm:$0xff]
        %v955 = vld [vmem:[#allocation7 + $0xe0] sm:$0xff]
        %v956 = vld [vmem:[#allocation7 + $0xe8] sm:$0xff]
        %v957 = vld [vmem:[#allocation7 + $0xf0] sm:$0xff]
        %v958 = vld [vmem:[#allocation7 + $0xf8] sm:$0xff]
        %v991 = vunpack.c.l.b16 %v927
        %v992 = vunpack.c.h.b16 %v927
        %v993 = vunpack.c.l.b16 %v928
        %v994 = vunpack.c.h.b16 %v928
        %v995 = vunpack.c.l.b16 %v929
        %v996 = vunpack.c.h.b16 %v929
        %v997 = vunpack.c.l.b16 %v930
        %v998 = vunpack.c.h.b16 %v930
        %v999 = vunpack.c.l.b16 %v931
        %v1000 = vunpack.c.h.b16 %v931
        %v1001 = vunpack.c.l.b16 %v932
        %v1002 = vunpack.c.h.b16 %v932
        %v1003 = vunpack.c.l.b16 %v933
        %v1004 = vunpack.c.h.b16 %v933
        %v1005 = vunpack.c.l.b16 %v934
        %v1006 = vunpack.c.h.b16 %v934
        %v1007 = vunpack.c.l.b16 %v935
        %v1008 = vunpack.c.h.b16 %v935
        %v1009 = vunpack.c.l.b16 %v936
        %v1010 = vunpack.c.h.b16 %v936
        %v1011 = vunpack.c.l.b16 %v937
        %v1012 = vunpack.c.h.b16 %v937
        %v1013 = vunpack.c.l.b16 %v938
        %v1014 = vunpack.c.h.b16 %v938
        %v1015 = vunpack.c.l.b16 %v939
        %v1016 = vunpack.c.h.b16 %v939
        %v1017 = vunpack.c.l.b16 %v940
        %v1018 = vunpack.c.h.b16 %v940
        %v1019 = vunpack.c.l.b16 %v941
        %v1020 = vunpack.c.h.b16 %v941
        %v1021 = vunpack.c.l.b16 %v942
        %v1022 = vunpack.c.h.b16 %v942
        %v1023 = vunpack.c.l.b16 %v943
        %v1024 = vunpack.c.h.b16 %v943
        %v1025 = vunpack.c.l.b16 %v944
        %v1026 = vunpack.c.h.b16 %v944
        %v1027 = vunpack.c.l.b16 %v945
        %v1028 = vunpack.c.h.b16 %v945
        %v1029 = vunpack.c.l.b16 %v946
        %v1030 = vunpack.c.h.b16 %v946
        %v1031 = vunpack.c.l.b16 %v947
        %v1032 = vunpack.c.h.b16 %v947
        %v1033 = vunpack.c.l.b16 %v948
        %v1034 = vunpack.c.h.b16 %v948
        %v1035 = vunpack.c.l.b16 %v949
        %v1036 = vunpack.c.h.b16 %v949
        %v1037 = vunpack.c.l.b16 %v950
        %v1038 = vunpack.c.h.b16 %v950
        %v1039 = vunpack.c.l.b16 %v951
        %v1040 = vunpack.c.h.b16 %v951
        %v1041 = vunpack.c.l.b16 %v952
        %v1042 = vunpack.c.h.b16 %v952
        %v1043 = vunpack.c.l.b16 %v953
        %v1044 = vunpack.c.h.b16 %v953
        %v1045 = vunpack.c.l.b16 %v954
        %v1046 = vunpack.c.h.b16 %v954
        %v1047 = vunpack.c.l.b16 %v955
        %v1048 = vunpack.c.h.b16 %v955
        %v1049 = vunpack.c.l.b16 %v956
        %v1050 = vunpack.c.h.b16 %v956
        %v1051 = vunpack.c.l.b16 %v957
        %v1052 = vunpack.c.h.b16 %v957
        %v1053 = vunpack.c.l.b16 %v958
        %v1054 = vunpack.c.h.b16 %v958
        %v1055 = vpack.c.b16 %v995, %v991
        %v1056 = vpack.c.b16 %v996, %v992
        %v1057 = vpack.c.b16 %v997, %v993
        %v1058 = vpack.c.b16 %v998, %v994
        %v1059 = vpack.c.b16 %v1003, %v999
        %v1060 = vpack.c.b16 %v1004, %v1000
        %v1061 = vpack.c.b16 %v1005, %v1001
        %v1062 = vpack.c.b16 %v1006, %v1002
        %v1063 = vpack.c.b16 %v1011, %v1007
        %v1064 = vpack.c.b16 %v1012, %v1008
        %v1065 = vpack.c.b16 %v1013, %v1009
        %v1066 = vpack.c.b16 %v1014, %v1010
        %v1067 = vpack.c.b16 %v1019, %v1015
        %v1068 = vpack.c.b16 %v1020, %v1016
        %v1069 = vpack.c.b16 %v1021, %v1017
        %v1070 = vpack.c.b16 %v1022, %v1018
        %v1071 = vpack.c.b16 %v1027, %v1023
        %v1072 = vpack.c.b16 %v1028, %v1024
        %v1073 = vpack.c.b16 %v1029, %v1025
        %v1074 = vpack.c.b16 %v1030, %v1026
        %v1075 = vpack.c.b16 %v1035, %v1031
        %v1076 = vpack.c.b16 %v1036, %v1032
        %v1077 = vpack.c.b16 %v1037, %v1033
        %v1078 = vpack.c.b16 %v1038, %v1034
        %v1079 = vpack.c.b16 %v1043, %v1039
        %v1080 = vpack.c.b16 %v1044, %v1040
        %v1081 = vpack.c.b16 %v1045, %v1041
        %v1082 = vpack.c.b16 %v1046, %v1042
        %v1083 = vpack.c.b16 %v1051, %v1047
        %v1084 = vpack.c.b16 %v1052, %v1048
        %v1085 = vpack.c.b16 %v1053, %v1049
        %v1086 = vpack.c.b16 %v1054, %v1050
        %1119 = vmatprep.subr.bf16.mxu0 %v1056
        %1120 = vmatpush1.bf16.xpose.msra.mxu0 %v1055
        %1121 = vmatprep.subr.bf16.mxu0 %v1060
        %1122 = vmatpush1.bf16.xpose.msra.mxu0 %v1059
        %1123 = vmatprep.subr.bf16.mxu0 %v1064
        %1124 = vmatpush1.bf16.xpose.msra.mxu0 %v1063
        %1125 = vmatprep.subr.bf16.mxu0 %v1068
        %1126 = vmatpush1.bf16.xpose.msra.mxu0 %v1067
        %1127 = vmatprep.subr.bf16.mxu0 %v1072
        %1128 = vmatpush1.bf16.xpose.msra.mxu0 %v1071
        %1129 = vmatprep.subr.bf16.mxu0 %v1076
        %1130 = vmatpush1.bf16.xpose.msra.mxu0 %v1075
        %1131 = vmatprep.subr.bf16.mxu0 %v1080
        %1132 = vmatpush1.bf16.xpose.msra.mxu0 %v1079
        %1133 = vmatprep.subr.bf16.mxu0 %v1084
        %1134 = vmatpush1.bf16.xpose.msra.mxu0 %v1083
        %1135 = vmatprep.subr.bf16.mxu0 0
        %1136 = vmatpush1.bf16.xpose.msra.mxu0 0
        %1137 = vmatprep.subr.bf16.mxu0 0
        %1138 = vmatpush1.bf16.xpose.msra.mxu0 0
        %1139 = vmatprep.subr.bf16.mxu0 0
        %1140 = vmatpush1.bf16.xpose.msra.mxu0 0
        %1141 = vmatprep.subr.bf16.mxu0 0
        %1142 = vmatpush1.bf16.xpose.msra.mxu0 0
        %1143 = vmatprep.subr.bf16.mxu0 0
        %1144 = vmatpush1.bf16.xpose.msra.mxu0 0
        %1145 = vmatprep.subr.bf16.mxu0 0
        %1146 = vmatpush1.bf16.xpose.msra.mxu0 0
        %1147 = vmatprep.subr.bf16.mxu0 0
        %1148 = vmatpush1.bf16.xpose.msra.mxu0 0
        %1149 = vmatprep.subr.bf16.mxu0 0
        %1150 = vmatpush1.bf16.xpose.msra.mxu0 0
        %1151 = vmatprep.mubr.bf16.mxu0 %v896
        %1152 = vmatmul.mubr.bf16.gmra.mrb[0].mxu0 %v895
        %v1153 = vpop.f32.mrb[0].mxu0
        %v1154 = vadd.f32 0.0, %v1153
        %v1155 = vpop.f32.mrb[0].mxu0
        %v1156 = vpop.f32.mrb[0].mxu0
        %v1157 = vadd.f32 0.0, %v1156
        %v1158 = vpop.f32.mrb[0].mxu0
        %1159 = vmatprep.mubr.bf16.mxu0 %v900
        %1160 = vmatmul.mubr.bf16.gmra.mrb[0].mxu0 %v899
        %v1161 = vpop.f32.mrb[0].mxu0
        %v1162 = vadd.f32 0.0, %v1161
        %v1163 = vpop.f32.mrb[0].mxu0
        %v1164 = vpop.f32.mrb[0].mxu0
        %v1165 = vadd.f32 0.0, %v1164
        %v1166 = vpop.f32.mrb[0].mxu0
        %1167 = vmatprep.mubr.bf16.mxu0 %v904
        %1168 = vmatmul.mubr.bf16.gmra.mrb[0].mxu0 %v903
        %v1169 = vpop.f32.mrb[0].mxu0
        %v1170 = vadd.f32 0.0, %v1169
        %v1171 = vpop.f32.mrb[0].mxu0
        %v1172 = vpop.f32.mrb[0].mxu0
        %v1173 = vadd.f32 0.0, %v1172
        %v1174 = vpop.f32.mrb[0].mxu0
        %1175 = vmatprep.mubr.bf16.mxu0 %v908
        %1176 = vmatmul.mubr.bf16.gmra.mrb[0].mxu0 %v907
        %v1177 = vpop.f32.mrb[0].mxu0
        %v1178 = vadd.f32 0.0, %v1177
        %v1179 = vpop.f32.mrb[0].mxu0
        %v1180 = vpop.f32.mrb[0].mxu0
        %v1181 = vadd.f32 0.0, %v1180
        %v1182 = vpop.f32.mrb[0].mxu0
        %1183 = vmatprep.mubr.bf16.mxu0 %v912
        %1184 = vmatmul.mubr.bf16.gmra.mrb[0].mxu0 %v911
        %v1185 = vpop.f32.mrb[0].mxu0
        %v1186 = vadd.f32 0.0, %v1185
        %v1187 = vpop.f32.mrb[0].mxu0
        %v1188 = vpop.f32.mrb[0].mxu0
        %v1189 = vadd.f32 0.0, %v1188
        %v1190 = vpop.f32.mrb[0].mxu0
        %1191 = vmatprep.mubr.bf16.mxu0 %v916
        %1192 = vmatmul.mubr.bf16.gmra.mrb[0].mxu0 %v915
        %v1193 = vpop.f32.mrb[0].mxu0
        %v1194 = vadd.f32 0.0, %v1193
        %v1195 = vpop.f32.mrb[0].mxu0
        %v1196 = vpop.f32.mrb[0].mxu0
        %v1197 = vadd.f32 0.0, %v1196
        %v1198 = vpop.f32.mrb[0].mxu0
        %1199 = vmatprep.mubr.bf16.mxu0 %v920
        %1200 = vmatmul.mubr.bf16.gmra.mrb[0].mxu0 %v919
        %v1201 = vpop.f32.mrb[0].mxu0
        %v1202 = vadd.f32 0.0, %v1201
        %v1203 = vpop.f32.mrb[0].mxu0
        %v1204 = vpop.f32.mrb[0].mxu0
        %v1205 = vadd.f32 0.0, %v1204
        %v1206 = vpop.f32.mrb[0].mxu0
        %1207 = vmatprep.mubr.bf16.mxu0 %v924
        %1208 = vmatmul.mubr.bf16.gmra.mrb[0].mxu0 %v923
        %v1209 = vpop.f32.mrb[0].mxu0
        %v1210 = vadd.f32 0.0, %v1209
        %v1211 = vpop.f32.mrb[0].mxu0
        %v1212 = vpop.f32.mrb[0].mxu0
        %v1213 = vadd.f32 0.0, %v1212
        %v1214 = vpop.f32.mrb[0].mxu0
        %1215 = vdwg.mxu0
        %1216 = vmatprep.subr.bf16.mxu0 %v1058
        %1217 = vmatpush1.bf16.xpose.msra.mxu0 %v1057
        %1218 = vmatprep.subr.bf16.mxu0 %v1062
        %1219 = vmatpush1.bf16.xpose.msra.mxu0 %v1061
        %1220 = vmatprep.subr.bf16.mxu0 %v1066
        %1221 = vmatpush1.bf16.xpose.msra.mxu0 %v1065
        %1222 = vmatprep.subr.bf16.mxu0 %v1070
        %1223 = vmatpush1.bf16.xpose.msra.mxu0 %v1069
        %1224 = vmatprep.subr.bf16.mxu0 %v1074
        %1225 = vmatpush1.bf16.xpose.msra.mxu0 %v1073
        %1226 = vmatprep.subr.bf16.mxu0 %v1078
        %1227 = vmatpush1.bf16.xpose.msra.mxu0 %v1077
        %1228 = vmatprep.subr.bf16.mxu0 %v1082
        %1229 = vmatpush1.bf16.xpose.msra.mxu0 %v1081
        %1230 = vmatprep.subr.bf16.mxu0 %v1086
        %1231 = vmatpush1.bf16.xpose.msra.mxu0 %v1085
        %1232 = vmatprep.subr.bf16.mxu0 0
        %1233 = vmatpush1.bf16.xpose.msra.mxu0 0
        %1234 = vmatprep.subr.bf16.mxu0 0
        %1235 = vmatpush1.bf16.xpose.msra.mxu0 0
        %1236 = vmatprep.subr.bf16.mxu0 0
        %1237 = vmatpush1.bf16.xpose.msra.mxu0 0
        %1238 = vmatprep.subr.bf16.mxu0 0
        %1239 = vmatpush1.bf16.xpose.msra.mxu0 0
        %1240 = vmatprep.subr.bf16.mxu0 0
        %1241 = vmatpush1.bf16.xpose.msra.mxu0 0
        %1242 = vmatprep.subr.bf16.mxu0 0
        %1243 = vmatpush1.bf16.xpose.msra.mxu0 0
        %1244 = vmatprep.subr.bf16.mxu0 0
        %1245 = vmatpush1.bf16.xpose.msra.mxu0 0
        %1246 = vmatprep.subr.bf16.mxu0 0
        %1247 = vmatpush1.bf16.xpose.msra.mxu0 0
        %1248 = vmatprep.mubr.bf16.mxu0 %v898
        %1249 = vmatmul.mubr.bf16.gmra.mrb[0].mxu0 %v897
        %v1250 = vpop.f32.mrb[0].mxu0
        %v1251 = vadd.f32 %v1154, %v1250
        %v1252 = vpop.f32.mrb[0].mxu0
        %v1253 = vpop.f32.mrb[0].mxu0
        %v1254 = vadd.f32 %v1157, %v1253
        %v1255 = vpop.f32.mrb[0].mxu0
        %1256 = vmatprep.mubr.bf16.mxu0 %v902
        %1257 = vmatmul.mubr.bf16.gmra.mrb[0].mxu0 %v901
        %v1258 = vpop.f32.mrb[0].mxu0
        %v1259 = vadd.f32 %v1162, %v1258
        %v1260 = vpop.f32.mrb[0].mxu0
        %v1261 = vpop.f32.mrb[0].mxu0
        %v1262 = vadd.f32 %v1165, %v1261
        %v1263 = vpop.f32.mrb[0].mxu0
        %1264 = vmatprep.mubr.bf16.mxu0 %v906
        %1265 = vmatmul.mubr.bf16.gmra.mrb[0].mxu0 %v905
        %v1266 = vpop.f32.mrb[0].mxu0
        %v1267 = vadd.f32 %v1170, %v1266
        %v1268 = vpop.f32.mrb[0].mxu0
        %v1269 = vpop.f32.mrb[0].mxu0
        %v1270 = vadd.f32 %v1173, %v1269
        %v1271 = vpop.f32.mrb[0].mxu0
        %1272 = vmatprep.mubr.bf16.mxu0 %v910
        %1273 = vmatmul.mubr.bf16.gmra.mrb[0].mxu0 %v909
        %v1274 = vpop.f32.mrb[0].mxu0
        %v1275 = vadd.f32 %v1178, %v1274
        %v1276 = vpop.f32.mrb[0].mxu0
        %v1277 = vpop.f32.mrb[0].mxu0
        %v1278 = vadd.f32 %v1181, %v1277
        %v1279 = vpop.f32.mrb[0].mxu0
        %1280 = vmatprep.mubr.bf16.mxu0 %v914
        %1281 = vmatmul.mubr.bf16.gmra.mrb[0].mxu0 %v913
        %v1282 = vpop.f32.mrb[0].mxu0
        %v1283 = vadd.f32 %v1186, %v1282
        %v1284 = vpop.f32.mrb[0].mxu0
        %v1285 = vpop.f32.mrb[0].mxu0
        %v1286 = vadd.f32 %v1189, %v1285
        %v1287 = vpop.f32.mrb[0].mxu0
        %1288 = vmatprep.mubr.bf16.mxu0 %v918
        %1289 = vmatmul.mubr.bf16.gmra.mrb[0].mxu0 %v917
        %v1290 = vpop.f32.mrb[0].mxu0
        %v1291 = vadd.f32 %v1194, %v1290
        %v1292 = vpop.f32.mrb[0].mxu0
        %v1293 = vpop.f32.mrb[0].mxu0
        %v1294 = vadd.f32 %v1197, %v1293
        %v1295 = vpop.f32.mrb[0].mxu0
        %1296 = vmatprep.mubr.bf16.mxu0 %v922
        %1297 = vmatmul.mubr.bf16.gmra.mrb[0].mxu0 %v921
        %v1298 = vpop.f32.mrb[0].mxu0
        %v1299 = vadd.f32 %v1202, %v1298
        %v1300 = vpop.f32.mrb[0].mxu0
        %v1301 = vpop.f32.mrb[0].mxu0
        %v1302 = vadd.f32 %v1205, %v1301
        %v1303 = vpop.f32.mrb[0].mxu0
        %1304 = vmatprep.mubr.bf16.mxu0 %v926
        %1305 = vmatmul.mubr.bf16.gmra.mrb[0].mxu0 %v925
        %v1306 = vpop.f32.mrb[0].mxu0
        %v1307 = vadd.f32 %v1210, %v1306
        %v1308 = vpop.f32.mrb[0].mxu0
        %v1309 = vpop.f32.mrb[0].mxu0
        %v1310 = vadd.f32 %v1213, %v1309
        %v1311 = vpop.f32.mrb[0].mxu0
        %1312 = vdwg.mxu0
        %1313 = vst [vmem:[%s217] sm:$0xff] %v1251
        %1314 = vst [vmem:[%s217 + $0x8] sm:$0xff] %v1254
        %1315 = vst [vmem:[%s217 + $0x10] sm:$0xff] %v1259
        %1316 = vst [vmem:[%s217 + $0x18] sm:$0xff] %v1262
        %1317 = vst [vmem:[%s217 + $0x20] sm:$0xff] %v1267
        %1318 = vst [vmem:[%s217 + $0x28] sm:$0xff] %v1270
        %1319 = vst [vmem:[%s217 + $0x30] sm:$0xff] %v1275
        %1320 = vst [vmem:[%s217 + $0x38] sm:$0xff] %v1278
        %1321 = vst [vmem:[%s217 + $0x40] sm:$0xff] %v1283
        %1322 = vst [vmem:[%s217 + $0x48] sm:$0xff] %v1286
        %1323 = vst [vmem:[%s217 + $0x50] sm:$0xff] %v1291
        %1324 = vst [vmem:[%s217 + $0x58] sm:$0xff] %v1294
        %1325 = vst [vmem:[%s217 + $0x60] sm:$0xff] %v1299
        %1326 = vst [vmem:[%s217 + $0x68] sm:$0xff] %v1302
        %1327 = vst [vmem:[%s217 + $0x70] sm:$0xff] %v1307
        %1328 = vst [vmem:[%s217 + $0x78] sm:$0xff] %v1310
        %s1329 = sand.u32 %s97, 1
        %s1330 = scalar_lea.sflag [#allocation4], %s1329
        %s1331 = sand.u32 %s97, 1
        %s1332 = smul.addr %s1331, 128
        %s1333 = scalar_lea.vmem [#allocation8], %s1332
        // Predicated region
        $region45: #{tpu_custom_call.1} parent=31 // pred_check
          %p1334 = pneg %p107
        $region46: #{tpu_custom_call.1} parent=31 // pred_check_branch
          %1336 = sbr.rel (%p1334) target = $region48
        $region47: #{tpu_custom_call.1} parent=31 // pred_region
          %s1337 = smul.u32 16, %s21
          %s1339 = ssub.s32 2048, 2048
          %1340 = vsyncadd %s1330, %s1339
          %s1341 = smul.addr %s1337, 128
          %s1342 = scalar_lea.hbm %s3, %s1341
          %s1343 = sshll.u32 %s1333, 4
          %s1344 = int_to_ptr.vmem [resolvable:$true] %s1343
          %1349 = dma.vmem_to_hbm [thread:$0]  %s1344, 2048, %s1342, %s1330, 128, 128, 8
        $region48: #{tpu_custom_call.1} parent=31 // pred_fallthru
          _
      $region32: #{tpu_custom_call.1} parent=5 // pred_fallthru
        _
      %p1350 = scmp.le.s32.totalorder 2, %s16
      // Predicated region
      $region49: #{tpu_custom_call.1} parent=5 // pred_check
        %p1351 = pneg %p1350
      $region50: #{tpu_custom_call.1} parent=5 // pred_check_branch
        %1353 = sbr.rel (%p1351) target = $region52
      $region51: #{tpu_custom_call.1} parent=5 // pred_region
        %s1354 = ssub.s32 %s16, 2
        // Predicated region
        $region53: #{tpu_custom_call.1} parent=51 // pred_check
          %p1355 = pneg %p113
        $region54: #{tpu_custom_call.1} parent=51 // pred_check_branch
          %1357 = sbr.rel (%p1355) target = $region56
        $region55: #{tpu_custom_call.1} parent=51 // pred_region
          %s1358 = sand.u32 %s98, 1
          %s1359 = scalar_lea.sflag [#allocation4], %s1358
          %s1360 = sand.u32 %s98, 1
          %s1361 = smul.addr %s1360, 128
          %s1362 = scalar_lea.vmem [#allocation8], %s1361
          %1363 = dma.done %s1359, 2048
        $region56: #{tpu_custom_call.1} parent=51 // pred_fallthru
          _
      $region52: #{tpu_custom_call.1} parent=5 // pred_fallthru
        _
    $region6: #{tpu_custom_call.1} parent=1 // loop_footer
      %s20 = sadd.s32 1, %s16
    $region7: #{tpu_custom_call.1} parent=1 // loop_footer_branch
      %15 = sbr.rel target = $region3
    $region8: #{tpu_custom_call.1} parent=1 // loop_exit
      _
    %1364 = vsyncpa [#allocation3], 1
    %s1365 = scalar_lea.sflag [#allocation3], 1
    %1366 = vsyncpa %s1365, 1
    %1367 = vsyncpa [#allocation6], 1
    %1368 = vsyncpa [#allocation4], 1
    %s1369 = scalar_lea.sflag [#allocation4], 1
    %1370 = vsyncpa %s1369, 1

</llo_original>
